<compile_context>
chip_gen: v5e
topology: v5e:2x2
jax: 0.10.0
libtpu: 0.0.40
codegen_flags: <defaults>
</compile_context>

<pallas_src>
import numpy as np
import jax
import jax.numpy as jnp
from jax.experimental import pallas as pl
from jax.experimental.pallas import tpu as pltpu


def _build_avg_matrix(seq_len: int, kernel_size: int, dtype) -> jax.Array:
    """(L, L) matrix: mean = W @ x implements the replicate-padded moving
    average along time. Edge replication is folded into the first/last
    columns (their weights are > 1/k near the boundaries)."""
    pad = (kernel_size - 1) // 2
    idx = np.arange(seq_len)
    w = np.zeros((seq_len, seq_len), dtype=np.float32)
    inv_k = 1.0 / float(kernel_size)
    for o in range(kernel_size):
        j = np.clip(idx - pad + o, 0, seq_len - 1)
        np.add.at(w, (idx, j), inv_k)
    return jnp.asarray(w, dtype=dtype)


def _vmem_capacity_bytes() -> int:
    """Generation-aware VMEM capacity; conservative (v7x) default on failure."""
    try:
        cap = getattr(pltpu.get_tpu_info(), "vmem_capacity_bytes", None)
        if cap:
            return int(cap)
    except Exception:
        pass
    return 64 * 1024 * 1024


def _pick_channel_tile(B: int, C: int, L: int, itemsize: int, budget_bytes: int):
    """Lane-dense channel tiling. Returns (TC, n_ct) with TC a multiple of 128
    (or the full C when C < 128)."""
    if C < 128:
        # Full-extent lane block (the only legal non-128-multiple width).
        # Masked stores, but the tile is tiny in this regime.
        # TODO(synk): halo-tile the time axis if L*C ever outgrows VMEM here.
        return C, 1
    groups_total = pl.cdiv(C, 128)            # number of 128-lane groups
    per_group = L * 128 * itemsize
    max_groups = max(1, budget_bytes // per_group)
    n_ct = pl.cdiv(groups_total, max_groups)
    # Keep >= 2 total grid steps so a dual-TensorCore chip (v7x) has work on
    # both cores and the double-buffer pipeline has something to overlap.
    if B * n_ct < 2 and groups_total >= 2:
        n_ct = 2
    # TC <= C guarantees every block start lies inside the array; only the
    # final block can be a (standard, masked) partial block.
    groups = max(1, min(pl.cdiv(groups_total, n_ct), C // 128))
    tc = groups * 128
    return tc, pl.cdiv(C, tc)


def _decomp_kernel(w_ref, x_ref, res_ref, mean_ref):
    x = x_ref[...]                                        # (L, TC), input dtype
    # Banded averaging matmul on the MXU; operands stay in the input dtype
    # (bf16-native on v5e/v6e/v7x), accumulation in f32.
    mean = jnp.dot(w_ref[...], x, preferred_element_type=jnp.float32)
    mean_out = mean.astype(mean_ref.dtype)
    mean_ref[...] = mean_out
    res_ref[...] = x - mean_out                           # no extra f32 tile temp


def series_decomp_pallas(x: jax.Array, kernel_size: int):
    """Returns (res, moving_mean), both shaped like x = (B, L, C)."""
    assert kernel_size % 2 == 1, (
        "kernel_size must be odd so res = x - moving_mean is well-shaped "
        "(same practical constraint as the PyTorch module)."
    )
    B, L, C = x.shape
    itemsize = jnp.dtype(x.dtype).itemsize
    w_dtype = jnp.bfloat16 if x.dtype == jnp.bfloat16 else jnp.float32
    w_itemsize = jnp.dtype(w_dtype).itemsize
    w = _build_avg_matrix(L, kernel_size, w_dtype)        # (L, L), static

    # --- generation-aware sizing -------------------------------------------
    vmem_cap = _vmem_capacity_bytes()
    pool = int(0.40 * vmem_cap)                           # share for pipeline bufs
    # per 128-lane group: 3 streams double-buffered + ~2 f32 matmul temps
    per_group = 6 * L * 128 * itemsize + 2 * L * 128 * 4
    groups_fit = max(1, (pool - 2 * L * L * w_itemsize) // per_group)
    budget_bytes = min(4 << 20, groups_fit * L * 128 * itemsize)
    budget_bytes = max(budget_bytes, L * 128 * itemsize)  # always >= one group

    TC, n_ct = _pick_channel_tile(B, C, L, itemsize, budget_bytes)

    tile_bytes = L * TC * itemsize
    est = 6 * tile_bytes + 2 * L * TC * 4 + 2 * L * L * w_itemsize
    vmem_limit = max(32 << 20, min(est + (4 << 20), int(0.9 * vmem_cap)))

    # --- specs ---------------------------------------------------------------
    xio_spec = pl.BlockSpec((None, L, TC), lambda b, c: (b, 0, c))
    out_shape = (
        jax.ShapeDtypeStruct((B, L, C), x.dtype),  # res
        jax.ShapeDtypeStruct((B, L, C), x.dtype),  # moving_mean
    )

    def make_call(buffered_w: bool):
        if buffered_w:
            w_spec = pl.BlockSpec((L, L), lambda b, c: (0, 0),
                                  pipeline_mode=pl.Buffered(1))
        else:
            w_spec = pl.BlockSpec((L, L), lambda b, c: (0, 0))
        return pl.pallas_call(
            _decomp_kernel,
            out_shape=out_shape,
            grid_spec=pltpu.PrefetchScalarGridSpec(
                num_scalar_prefetch=0,
                grid=(B, n_ct),
                in_specs=[w_spec, xio_spec],
                out_specs=(xio_spec, xio_spec),
            ),
            compiler_params=pltpu.CompilerParams(
                dimension_semantics=("parallel", "parallel"),
                vmem_limit_bytes=int(vmem_limit),
            ),
        )

    try:
        return make_call(True)(w, x)
    except Exception:
        # pl.Buffered(1) on a BlockSpec is not accepted everywhere; the
        # constant index_map already avoids re-fetching W, so fall back.
        return make_call(False)(w, x)


def series_decomp_ref(x: jax.Array, kernel_size: int):
    """Pure-JAX reference mirroring the PyTorch module."""
    pad = (kernel_size - 1) // 2
    front = jnp.repeat(x[:, 0:1, :], pad, axis=1)
    end = jnp.repeat(x[:, -1:, :], pad, axis=1)
    xp = jnp.concatenate([front, x, end], axis=1)  # (B, L + 2*pad, C)
    L = x.shape[1]
    mean = jnp.mean(
        jnp.stack([xp[:, o:o + L, :] for o in range(kernel_size)], axis=0), axis=0
    )
    return x - mean, mean


def _check(B, L, C, kernel_size, key, dtype=jnp.float32, atol=1e-5, rtol=1e-5):
    x = jax.random.normal(key, (B, L, C), dtype=jnp.float32).astype(dtype)
    res, mean = series_decomp_pallas(x, kernel_size)
    jax.block_until_ready((res, mean))
    res_ref, mean_ref = series_decomp_ref(x.astype(jnp.float32), kernel_size)
    assert jnp.allclose(mean.astype(jnp.float32), mean_ref, atol=atol, rtol=rtol), (
        f"moving_mean mismatch (B={B}, L={L}, C={C}, k={kernel_size}, {dtype})")
    assert jnp.allclose(res.astype(jnp.float32), res_ref, atol=atol, rtol=rtol), (
        f"res mismatch (B={B}, L={L}, C={C}, k={kernel_size}, {dtype})")


if __name__ == "__main__":
    key = jax.random.PRNGKey(0)
    k1, k2, k3, k4 = jax.random.split(key, 4)

    # 1) small, C < 128 -> full-extent lane block path.
    _check(B=2, L=16, C=32, kernel_size=5, key=k1)

    # 2) 128-aligned channels -> single contiguous (L, C) block per batch step.
    _check(B=2, L=24, C=256, kernel_size=7, key=k2)

    # 3) C > 128 but not 128-aligned -> cdiv grid with masked tail block, and
    #    bf16 operands fed straight to the MXU.
    _check(B=2, L=16, C=160, kernel_size=3, key=k3, dtype=jnp.bfloat16,
           atol=6e-2, rtol=6e-2)

    # 4) B=1 -> channel axis split so a dual-TC chip still gets >= 2 blocks.
    _check(B=1, L=16, C=256, kernel_size=3, key=k4)

    print("KERNEL_OK")
</pallas_src>

<mosaic_0001>
module attributes {stable_mosaic.version = 11 : i64} {
  func.func @_decomp_kernel(%arg0: i32, %arg1: i32, %arg2: memref<16x16xf32, #tpu.memory_space<vmem>>, %arg3: memref<1x16x32xf32, #tpu.memory_space<vmem>>, %arg4: memref<1x16x32xf32, #tpu.memory_space<vmem>>, %arg5: memref<1x16x32xf32, #tpu.memory_space<vmem>>) attributes {dimension_semantics = [#tpu.dimension_semantics<parallel>, #tpu.dimension_semantics<parallel>], iteration_bounds = array<i64: 2, 1>, scalar_prefetch = 0 : i64, scratch_operands = 0 : i64, tpu.core_type = #tpu.core_type<tc>, window_params = [{pipeline_mode = #tpu.pipeline_mode<synchronous>, transform_indices = @transform_0, window_bounds = array<i64: 16, 16>}, {transform_indices = @transform_1, window_bounds = array<i64: 1, 16, 32>}, {transform_indices = @transform_2, window_bounds = array<i64: 1, 16, 32>}, {transform_indices = @transform_3, window_bounds = array<i64: 1, 16, 32>}]} {
    %c0 = arith.constant 0 : index
    %c0_0 = arith.constant 0 : index
    %c0_1 = arith.constant 0 : index
    %0 = vector.load %arg3[%c0, %c0_0, %c0_1] : memref<1x16x32xf32, #tpu.memory_space<vmem>>, vector<1x16x32xf32>
    %1 = vector.shape_cast %0 : vector<1x16x32xf32> to vector<16x32xf32>
    %c0_2 = arith.constant 0 : index
    %c0_3 = arith.constant 0 : index
    %2 = vector.load %arg2[%c0_2, %c0_3] : memref<16x16xf32, #tpu.memory_space<vmem>>, vector<16x16xf32>
    %cst = arith.constant dense<0.000000e+00> : vector<16x32xf32>
    %3 = tpu.matmul %2, %1, %cst {dimension_numbers = #tpu.dot_dimension_numbers<[1], [0], [0], [1], [0, 0, 1, 1], [], []>} : vector<16x16xf32>, vector<16x32xf32>, vector<16x32xf32> -> vector<16x32xf32>
    %c0_4 = arith.constant 0 : index
    %c0_5 = arith.constant 0 : index
    %c0_6 = arith.constant 0 : index
    %4 = vector.load %arg5[%c0_4, %c0_5, %c0_6] : memref<1x16x32xf32, #tpu.memory_space<vmem>>, vector<1x16x32xf32>
    %5 = vector.shape_cast %4 : vector<1x16x32xf32> to vector<16x32xf32>
    %6 = vector.shape_cast %3 : vector<16x32xf32> to vector<1x16x32xf32>
    tpu.vector_store %arg5[%c0_4, %c0_5, %c0_6], %6 {strides = array<i32>} : memref<1x16x32xf32, #tpu.memory_space<vmem>>, vector<1x16x32xf32>,
    %7 = arith.subf %1, %3 : vector<16x32xf32>
    %c0_7 = arith.constant 0 : index
    %c0_8 = arith.constant 0 : index
    %c0_9 = arith.constant 0 : index
    %8 = vector.load %arg4[%c0_7, %c0_8, %c0_9] : memref<1x16x32xf32, #tpu.memory_space<vmem>>, vector<1x16x32xf32>
    %9 = vector.shape_cast %8 : vector<1x16x32xf32> to vector<16x32xf32>
    %10 = vector.shape_cast %7 : vector<16x32xf32> to vector<1x16x32xf32>
    tpu.vector_store %arg4[%c0_7, %c0_8, %c0_9], %10 {strides = array<i32>} : memref<1x16x32xf32, #tpu.memory_space<vmem>>, vector<1x16x32xf32>,
    return
  }
  func.func @transform_0(%arg0: i32, %arg1: i32) -> (i32, i32) {
    %c0_i32 = arith.constant 0 : i32
    %c0_i32_0 = arith.constant 0 : i32
    %c0_i32_1 = arith.constant 0 : i32
    return %c0_i32, %c0_i32_0 : i32, i32
  }
  func.func @transform_1(%arg0: i32, %arg1: i32) -> (i32, i32, i32) {
    %c0_i32 = arith.constant 0 : i32
    %c0_i32_0 = arith.constant 0 : i32
    return %arg0, %c0_i32, %arg1 : i32, i32, i32
  }
  func.func @transform_2(%arg0: i32, %arg1: i32) -> (i32, i32, i32) {
    %c0_i32 = arith.constant 0 : i32
    %c0_i32_0 = arith.constant 0 : i32
    return %arg0, %c0_i32, %arg1 : i32, i32, i32
  }
  func.func @transform_3(%arg0: i32, %arg1: i32) -> (i32, i32, i32) {
    %c0_i32 = arith.constant 0 : i32
    %c0_i32_0 = arith.constant 0 : i32
    return %arg0, %c0_i32, %arg1 : i32, i32, i32
  }
}

module attributes {stable_mosaic.version = 11 : i64} {
  func.func @_decomp_kernel(%arg0: i32, %arg1: i32, %arg2: memref<16x16xf32, #tpu.memory_space<vmem>>, %arg3: memref<1x16x32xf32, #tpu.memory_space<vmem>>, %arg4: memref<1x16x32xf32, #tpu.memory_space<vmem>>, %arg5: memref<1x16x32xf32, #tpu.memory_space<vmem>>) attributes {dimension_semantics = [#tpu.dimension_semantics<parallel>, #tpu.dimension_semantics<parallel>], iteration_bounds = array<i64: 2, 1>, scalar_prefetch = 0 : i64, scratch_operands = 0 : i64, tpu.core_type = #tpu.core_type<tc>, window_params = [{pipeline_mode = #tpu.pipeline_mode<synchronous>, transform_indices = @transform_0, window_bounds = array<i64: 16, 16>}, {transform_indices = @transform_1, window_bounds = array<i64: 1, 16, 32>}, {transform_indices = @transform_2, window_bounds = array<i64: 1, 16, 32>}, {transform_indices = @transform_3, window_bounds = array<i64: 1, 16, 32>}]} {
    %c0 = arith.constant 0 : index
    %c0_0 = arith.constant 0 : index
    %c0_1 = arith.constant 0 : index
    %0 = vector.load %arg3[%c0, %c0_0, %c0_1] : memref<1x16x32xf32, #tpu.memory_space<vmem>>, vector<1x16x32xf32>
    %1 = vector.shape_cast %0 : vector<1x16x32xf32> to vector<16x32xf32>
    %c0_2 = arith.constant 0 : index
    %c0_3 = arith.constant 0 : index
    %2 = vector.load %arg2[%c0_2, %c0_3] : memref<16x16xf32, #tpu.memory_space<vmem>>, vector<16x16xf32>
    %cst = arith.constant dense<0.000000e+00> : vector<16x32xf32>
    %3 = tpu.matmul %2, %1, %cst {dimension_numbers = #tpu.dot_dimension_numbers<[1], [0], [0], [1], [0, 0, 1, 1], [], []>} : vector<16x16xf32>, vector<16x32xf32>, vector<16x32xf32> -> vector<16x32xf32>
    %c0_4 = arith.constant 0 : index
    %c0_5 = arith.constant 0 : index
    %c0_6 = arith.constant 0 : index
    %4 = vector.load %arg5[%c0_4, %c0_5, %c0_6] : memref<1x16x32xf32, #tpu.memory_space<vmem>>, vector<1x16x32xf32>
    %5 = vector.shape_cast %4 : vector<1x16x32xf32> to vector<16x32xf32>
    %6 = vector.shape_cast %3 : vector<16x32xf32> to vector<1x16x32xf32>
    tpu.vector_store %arg5[%c0_4, %c0_5, %c0_6], %6 {strides = array<i32>} : memref<1x16x32xf32, #tpu.memory_space<vmem>>, vector<1x16x32xf32>,
    %7 = arith.subf %1, %3 : vector<16x32xf32>
    %c0_7 = arith.constant 0 : index
    %c0_8 = arith.constant 0 : index
    %c0_9 = arith.constant 0 : index
    %8 = vector.load %arg4[%c0_7, %c0_8, %c0_9] : memref<1x16x32xf32, #tpu.memory_space<vmem>>, vector<1x16x32xf32>
    %9 = vector.shape_cast %8 : vector<1x16x32xf32> to vector<16x32xf32>
    %10 = vector.shape_cast %7 : vector<16x32xf32> to vector<1x16x32xf32>
    tpu.vector_store %arg4[%c0_7, %c0_8, %c0_9], %10 {strides = array<i32>} : memref<1x16x32xf32, #tpu.memory_space<vmem>>, vector<1x16x32xf32>,
    return
  }
  func.func @transform_0(%arg0: i32, %arg1: i32) -> (i32, i32) {
    %c0_i32 = arith.constant 0 : i32
    %c0_i32_0 = arith.constant 0 : i32
    %c0_i32_1 = arith.constant 0 : i32
    return %c0_i32, %c0_i32_0 : i32, i32
  }
  func.func @transform_1(%arg0: i32, %arg1: i32) -> (i32, i32, i32) {
    %c0_i32 = arith.constant 0 : i32
    %c0_i32_0 = arith.constant 0 : i32
    return %arg0, %c0_i32, %arg1 : i32, i32, i32
  }
  func.func @transform_2(%arg0: i32, %arg1: i32) -> (i32, i32, i32) {
    %c0_i32 = arith.constant 0 : i32
    %c0_i32_0 = arith.constant 0 : i32
    return %arg0, %c0_i32, %arg1 : i32, i32, i32
  }
  func.func @transform_3(%arg0: i32, %arg1: i32) -> (i32, i32, i32) {
    %c0_i32 = arith.constant 0 : i32
    %c0_i32_0 = arith.constant 0 : i32
    return %arg0, %c0_i32, %arg1 : i32, i32, i32
  }
}

</mosaic_0001>

<llo_original>
// kernel: tpu_custom_call.1
$region0: #{tpu_custom_call.1}
  #allocation0 [shape = 'u32[]', space=smem, size = 0x4, offset = 0x4, fixed_abs, tag = 'smem constant byte address 0x4 - core index']
  #allocation1 [shape = 'u32[72,128]{1,0:T(1,128)}', space=vmem, size = 0x9000, scoped, tag = 'internal scratch']
  %s0 = inlined_call_operand.hbm [shape: f32[16,16], index: 0, kind: input, shape index: {}]
  %s1 = inlined_call_operand.hbm [shape: f32[2,16,32], index: 1, kind: input, shape index: {}]
  %s2 = inlined_call_operand.hbm [shape: f32[2,16,32], index: 2, kind: output, shape index: {0}]
  %s3 = inlined_call_operand.hbm [shape: f32[2,16,32], index: 3, kind: output, shape index: {1}]
  %4 = xla_tuple %s2, %s3
  %s5 = sld [smem:[#allocation0]]
  $region57: #{tpu_custom_call.1} parent=0
    _
  %s7 = ssub.s32 1, %s5
  %s8 = scalar_select 0, %s7, %s5
  $region1: #{tpu_custom_call.1} parent=0
    #allocation2 [shape = 'u8[8192]{0}', space=vmem, size = 0x2000, scoped, tag = 'input window, operand 0, single buffered']
    #allocation3 [shape = 's32[2]{0}', space=sflag, size = 0x8, scoped, tag = 'scoped memory for tpu_custom_call.1']
    #allocation4 [shape = 's32[2]{0}', space=sflag, size = 0x8, scoped, tag = 'scoped memory for tpu_custom_call.1']
    #allocation5 [shape = 'u8[16384]{0}', space=vmem, size = 0x4000, scoped, tag = 'input window, operand 1']
    #allocation6 [shape = 's32[2]{0}', space=sflag, size = 0x8, scoped, tag = 'scoped memory for tpu_custom_call.1']
    #allocation7 [shape = 'u8[16384]{0}', space=vmem, size = 0x4000, scoped, tag = 'output window, operand 0']
    #allocation8 [shape = 'u8[16384]{0}', space=vmem, size = 0x4000, scoped, tag = 'output window, operand 1']
    #allocation9 [shape = 's32[2]{0}', space=sflag, size = 0x8, scoped, tag = 'scoped memory for tpu_custom_call.1']
    %9 = vsyncpa [#allocation3], 0
    %10 = vsyncpa [#allocation6], 0
    %s11 = scalar_lea.sflag [#allocation6], 1
    %12 = vsyncpa %s11, 0
    %13 = vsyncpa [#allocation4], 0
    %s14 = scalar_lea.sflag [#allocation4], 1
    %15 = vsyncpa %s14, 0
    %16 = vsyncpa [#allocation9], 0
    %s17 = scalar_lea.sflag [#allocation9], 1
    %18 = vsyncpa %s17, 0
    loop: start=0, step=1, limit=4
    $region2: #{tpu_custom_call.1} parent=1 // loop_pre_header
      _
    $region3: #{tpu_custom_call.1} parent=1 // loop_header
      %s20 = sphi 0, %s24
      %p21 = scmp.ge.s32.totalorder %s20, 4
      %s27 = sphi 0, %s39
      %s28 = sphi 0, %s35
      %s29 = sphi 0, %s27
      %s30 = sphi 0, %s28
      %s31 = sphi 0, %s29
      %s32 = sphi 0, %s30
      %s40 = sphi 0, %s40
      %s42 = sphi 0, %s40
      %s43 = sphi 0, %s42
      %s57 = sphi 0, %s43
      %s65 = sphi 0, %s67
      %s68 = sphi 0, %s65
      %s69 = sphi 0, %s68
      %s85 = sphi 0, %s69
      %s93 = sphi 0, %s95
      %s96 = sphi 0, %s93
      %s97 = sphi 0, %s96
      %s113 = sphi 0, %s97
      %s121 = sphi 0, %s123
      %s124 = sphi 0, %s121
      %s125 = sphi 0, %s124
      %s141 = sphi 0, %s125
    $region4: #{tpu_custom_call.1} parent=1 // loop_header_branch
      %23 = sbr.rel (%p21) target = $region8
    $region5: #{tpu_custom_call.1} parent=1 // loop_body
      %s25 = ssub.s32 %s20, 1
      %s26 = ssub.s32 %s20, 2
      %s33 = sadd.s32 1, %s28
      %p34 = scmp.ge.s32.totalorder %s33, 1
      %s35 = scalar_select %p34, 0, %s33
      %s36 = sadd.s32 1, %s27
      %s37 = scalar_select %p34, %s36, %s27
      %p38 = scmp.ge.s32.totalorder %s37, 2
      %s39 = scalar_select %p38, 0, %s37
      %s41 = sadd.s32 %s40, 1
      %p44 = scmp.eq.s32.totalorder %s20, 1
      %p45 = scmp.ne.s32.totalorder %s40, %s42
      %p46 = scmp.eq.s32.totalorder %s20, 0
      %p47 = por %p45, %p46
      %p48 = scmp.ne.s32.totalorder %s40, %s42
      %p49 = scmp.eq.s32.totalorder %s25, 1
      %p50 = por %p48, %p49
      %p51 = scmp.ne.s32.totalorder %s42, %s43
      %p52 = scmp.eq.s32.totalorder %s25, 0
      %p53 = por %p51, %p52
      %p54 = scmp.ne.s32.totalorder %s42, %s43
      %p55 = scmp.eq.s32.totalorder %s26, 1
      %p56 = por %p54, %p55
      %p58 = scmp.ne.s32.totalorder %s43, %s57
      %p59 = scmp.eq.s32.totalorder %s26, 0
      %p60 = por %p58, %p59
      %s61 = ssub.s32 %s27, %s39
      %s62 = ssub.s32 %s28, %s35
      %s63 = sor.u32 %s61, %s62
      %p64 = scmp.eq.s32.totalorder %s63, 0
      %s66 = sadd.s32 %s65, 1
      %s67 = scalar_select %p64, %s65, %s66
      %p70 = pneg %p64
      %p71 = scmp.eq.s32.totalorder %s20, 1
      %p72 = por %p70, %p71
      %p73 = scmp.ne.s32.totalorder %s65, %s68
      %p74 = scmp.eq.s32.totalorder %s20, 0
      %p75 = por %p73, %p74
      %p76 = scmp.ne.s32.totalorder %s65, %s68
      %p77 = scmp.eq.s32.totalorder %s25, 1
      %p78 = por %p76, %p77
      %p79 = scmp.ne.s32.totalorder %s68, %s69
      %p80 = scmp.eq.s32.totalorder %s25, 0
      %p81 = por %p79, %p80
      %p82 = scmp.ne.s32.totalorder %s68, %s69
      %p83 = scmp.eq.s32.totalorder %s26, 1
      %p84 = por %p82, %p83
      %p86 = scmp.ne.s32.totalorder %s69, %s85
      %p87 = scmp.eq.s32.totalorder %s26, 0
      %p88 = por %p86, %p87
      %s89 = ssub.s32 %s27, %s39
      %s90 = ssub.s32 %s28, %s35
      %s91 = sor.u32 %s89, %s90
      %p92 = scmp.eq.s32.totalorder %s91, 0
      %s94 = sadd.s32 %s93, 1
      %s95 = scalar_select %p92, %s93, %s94
      %p98 = pneg %p92
      %p99 = scmp.eq.s32.totalorder %s20, 1
      %p100 = por %p98, %p99
      %p101 = scmp.ne.s32.totalorder %s93, %s96
      %p102 = scmp.eq.s32.totalorder %s20, 0
      %p103 = por %p101, %p102
      %p104 = scmp.ne.s32.totalorder %s93, %s96
      %p105 = scmp.eq.s32.totalorder %s25, 1
      %p106 = por %p104, %p105
      %p107 = scmp.ne.s32.totalorder %s96, %s97
      %p108 = scmp.eq.s32.totalorder %s25, 0
      %p109 = por %p107, %p108
      %p110 = scmp.ne.s32.totalorder %s96, %s97
      %p111 = scmp.eq.s32.totalorder %s26, 1
      %p112 = por %p110, %p111
      %p114 = scmp.ne.s32.totalorder %s97, %s113
      %p115 = scmp.eq.s32.totalorder %s26, 0
      %p116 = por %p114, %p115
      %s117 = ssub.s32 %s27, %s39
      %s118 = ssub.s32 %s28, %s35
      %s119 = sor.u32 %s117, %s118
      %p120 = scmp.eq.s32.totalorder %s119, 0
      %s122 = sadd.s32 %s121, 1
      %s123 = scalar_select %p120, %s121, %s122
      %p126 = pneg %p120
      %p127 = scmp.eq.s32.totalorder %s20, 1
      %p128 = por %p126, %p127
      %p129 = scmp.ne.s32.totalorder %s121, %s124
      %p130 = scmp.eq.s32.totalorder %s20, 0
      %p131 = por %p129, %p130
      %p132 = scmp.ne.s32.totalorder %s121, %s124
      %p133 = scmp.eq.s32.totalorder %s25, 1
      %p134 = por %p132, %p133
      %p135 = scmp.ne.s32.totalorder %s124, %s125
      %p136 = scmp.eq.s32.totalorder %s25, 0
      %p137 = por %p135, %p136
      %p138 = scmp.ne.s32.totalorder %s124, %s125
      %p139 = scmp.eq.s32.totalorder %s26, 1
      %p140 = por %p138, %p139
      %p142 = scmp.ne.s32.totalorder %s125, %s141
      %p143 = scmp.eq.s32.totalorder %s26, 0
      %p144 = por %p142, %p143
      %p145 = scmp.le.s32.totalorder 1, %s20
      %p146 = scmp.lt.s32.totalorder %s20, 3
      %p147 = pnand %p145, %p146
      %p148 = pneg %p147
      // Predicated region
      $region9: #{tpu_custom_call.1} parent=5 // pred_check
        _
      $region10: #{tpu_custom_call.1} parent=5 // pred_check_branch
        %150 = sbr.rel (%p147) target = $region12
      $region11: #{tpu_custom_call.1} parent=5 // pred_region
        %s151 = ssub.s32 %s20, 1
        // Predicated region
        $region13: #{tpu_custom_call.1} parent=11 // pred_check
          %p152 = pneg %p53
        $region14: #{tpu_custom_call.1} parent=11 // pred_check_branch
          %154 = sbr.rel (%p152) target = $region16
        $region15: #{tpu_custom_call.1} parent=11 // pred_region
          %156 = vsyncadd [#allocation3], 0
          %s157 = sshll.u32 %s0, 4
          %s158 = int_to_ptr.hbm [resolvable:$true] %s157
          %s159 = sshll.u32 [#allocation2], 4
          %s160 = int_to_ptr.vmem [resolvable:$true] %s159
          %165 = dma.hbm_to_vmem [thread:$0]  %s158, 256, %s160, [#allocation3], 128, 128, 8
        $region16: #{tpu_custom_call.1} parent=11 // pred_fallthru
          _
      $region12: #{tpu_custom_call.1} parent=5 // pred_fallthru
        _
      %p166 = scmp.lt.s32.totalorder %s20, 2
      // Predicated region
      $region17: #{tpu_custom_call.1} parent=5 // pred_check
        %p167 = pneg %p166
      $region18: #{tpu_custom_call.1} parent=5 // pred_check_branch
        %169 = sbr.rel (%p167) target = $region20
      $region19: #{tpu_custom_call.1} parent=5 // pred_region
        // Predicated region
        $region21: #{tpu_custom_call.1} parent=19 // pred_check
          %p170 = pneg %p75
        $region22: #{tpu_custom_call.1} parent=19 // pred_check_branch
          %172 = sbr.rel (%p170) target = $region24
        $region23: #{tpu_custom_call.1} parent=19 // pred_region
          %s173 = sand.u32 %s65, 1
          %s174 = scalar_lea.sflag [#allocation6], %s173
          %s175 = sand.u32 %s65, 1
          %s176 = smul.addr %s175, 16
          %s177 = scalar_lea.vmem [#allocation5], %s176
          %179 = vsyncadd %s174, 0
          %s180 = smul.addr %s27, 2
          %s181 = sadd.s32 %s28, %s180
          %s182 = smul.addr %s181, 8
          %s183 = scalar_lea.hbm %s1, %s182
          %s184 = sshll.u32 %s183, 4
          %s185 = int_to_ptr.hbm [resolvable:$true] %s184
          %s186 = sshll.u32 %s177, 4
          %s187 = int_to_ptr.vmem [resolvable:$true] %s186
          %192 = dma.hbm_to_vmem [thread:$0]  %s185, 256, %s187, %s174, 128, 128, 8
        $region24: #{tpu_custom_call.1} parent=19 // pred_fallthru
          _
      $region20: #{tpu_custom_call.1} parent=5 // pred_fallthru
        _
      %p193 = scmp.le.s32.totalorder 1, %s20
      %p194 = scmp.lt.s32.totalorder %s20, 3
      %p195 = pnand %p193, %p194
      %p196 = pneg %p195
      // Predicated region
      $region25: #{tpu_custom_call.1} parent=5 // pred_check
        _
      $region26: #{tpu_custom_call.1} parent=5 // pred_check_branch
        %198 = sbr.rel (%p195) target = $region28
      $region27: #{tpu_custom_call.1} parent=5 // pred_region
        %s199 = ssub.s32 %s20, 1
        // Predicated region
        $region29: #{tpu_custom_call.1} parent=27 // pred_check
          %p200 = pneg %p53
        $region30: #{tpu_custom_call.1} parent=27 // pred_check_branch
          %202 = sbr.rel (%p200) target = $region32
        $region31: #{tpu_custom_call.1} parent=27 // pred_region
          %204 = dma.done [#allocation3], 256
        $region32: #{tpu_custom_call.1} parent=27 // pred_fallthru
          _
        %s205 = sand.u32 %s68, 1
        %s206 = scalar_lea.sflag [#allocation6], %s205
        %s207 = sand.u32 %s68, 1
        %s208 = smul.addr %s207, 16
        %s209 = scalar_lea.vmem [#allocation5], %s208
        // Predicated region
        $region33: #{tpu_custom_call.1} parent=27 // pred_check
          %p210 = pneg %p81
        $region34: #{tpu_custom_call.1} parent=27 // pred_check_branch
          %212 = sbr.rel (%p210) target = $region36
        $region35: #{tpu_custom_call.1} parent=27 // pred_region
          %214 = dma.done %s206, 256
        $region36: #{tpu_custom_call.1} parent=27 // pred_fallthru
          _
        %p215 = pneg %p53
        %p216 = pneg %p50
        %s217 = sand.u32 %s68, 1
        %s218 = scalar_lea.sflag [#allocation6], %s217
        %s219 = sand.u32 %s68, 1
        %s220 = smul.addr %s219, 16
        %s221 = scalar_lea.vmem [#allocation5], %s220
        %p222 = pneg %p81
        %p223 = pneg %p78
        %p224 = pneg %p109
        %p225 = pneg %p106
        %s226 = sand.u32 %s96, 1
        %s227 = scalar_lea.sflag [#allocation4], %s226
        %s228 = sand.u32 %s96, 1
        %s229 = smul.addr %s228, 16
        %s230 = scalar_lea.vmem [#allocation7], %s229
        %p231 = pneg %p137
        %p232 = pneg %p134
        %s233 = sand.u32 %s124, 1
        %s234 = scalar_lea.sflag [#allocation9], %s233
        %s235 = sand.u32 %s124, 1
        %s236 = smul.addr %s235, 16
        %s237 = scalar_lea.vmem [#allocation8], %s236
        %v238 = vld [vmem:[%s209] sm:$0xff]
        %v239 = vld [vmem:[%s209 + $0x8] sm:$0xff]
        %v240 = vld [vmem:[#allocation2] sm:$0xff]
        %v241 = vld [vmem:[#allocation2 + $0x8] sm:$0xff]
        %vm242 = vcmask 130048
        %v244 = vsel %vm242, %v240, 0
        %v247 = vsel %vm242, %v241, 0
        %249 = vmatpush.msra.mxu0 0.0
        %250 = vmatpush.msra.mxu0 0.0
        %251 = vmatpush.msra.mxu0 0.0
        %252 = vmatpush.msra.mxu0 0.0
        %253 = vmatpush.msra.mxu0 0.0
        %254 = vmatpush.msra.mxu0 0.0
        %255 = vmatpush.msra.mxu0 0.0
        %256 = vmatpush.msra.mxu0 0.0
        %257 = vmatpush.msra.mxu0 0.0
        %258 = vmatpush.msra.mxu0 0.0
        %259 = vmatpush.msra.mxu0 0.0
        %260 = vmatpush.msra.mxu0 0.0
        %261 = vmatpush.msra.mxu0 0.0
        %262 = vmatpush.msra.mxu0 0.0
        %263 = vmatpush.msra.mxu0 %v239
        %264 = vmatpush.msra.mxu0 %v238
        %265 = vmatmul.f32.gmra.mxu0 %v244
        %v266 = vpop.f32.mrf.mxu0
        %v267 = vadd.f32 0.0, %v266
        %268 = vmatmul.f32.gmra.mxu0 %v247
        %v269 = vpop.f32.mrf.mxu0
        %v270 = vadd.f32 0.0, %v269
        %271 = vdwg.mxu0
        %vm272 = vcmask 261120
        %273 = vst.msk [vmem:[%s237] sm:$0xff] %vm272, %v267
        %274 = vst.msk [vmem:[%s237 + $0x8] sm:$0xff] %vm272, %v270
        %v275 = vsub.f32 %v238, %v267
        %v276 = vsub.f32 %v239, %v270
        %277 = vst.msk [vmem:[%s230] sm:$0xff] %vm272, %v275
        %278 = vst.msk [vmem:[%s230 + $0x8] sm:$0xff] %vm272, %v276
        %s279 = sand.u32 %s96, 1
        %s280 = scalar_lea.sflag [#allocation4], %s279
        %s281 = sand.u32 %s96, 1
        %s282 = smul.addr %s281, 16
        %s283 = scalar_lea.vmem [#allocation7], %s282
        %s284 = sand.u32 %s124, 1
        %s285 = scalar_lea.sflag [#allocation9], %s284
        %s286 = sand.u32 %s124, 1
        %s287 = smul.addr %s286, 16
        %s288 = scalar_lea.vmem [#allocation8], %s287
        // Predicated region
        $region37: #{tpu_custom_call.1} parent=27 // pred_check
          %p289 = pneg %p106
        $region38: #{tpu_custom_call.1} parent=27 // pred_check_branch
          %291 = sbr.rel (%p289) target = $region40
        $region39: #{tpu_custom_call.1} parent=27 // pred_region
          %293 = vsyncadd %s280, 0
          %s294 = smul.addr %s29, 2
          %s295 = sadd.s32 %s30, %s294
          %s296 = smul.addr %s295, 8
          %s297 = scalar_lea.hbm %s2, %s296
          %s298 = sshll.u32 %s283, 4
          %s299 = int_to_ptr.vmem [resolvable:$true] %s298
          %s300 = sshll.u32 %s297, 4
          %s301 = int_to_ptr.hbm [resolvable:$true] %s300
          %306 = dma.vmem_to_hbm [thread:$0]  %s299, 256, %s301, %s280, 128, 128, 8
        $region40: #{tpu_custom_call.1} parent=27 // pred_fallthru
          _
        // Predicated region
        $region41: #{tpu_custom_call.1} parent=27 // pred_check
          %p307 = pneg %p134
        $region42: #{tpu_custom_call.1} parent=27 // pred_check_branch
          %309 = sbr.rel (%p307) target = $region44
        $region43: #{tpu_custom_call.1} parent=27 // pred_region
          %311 = vsyncadd %s285, 0
          %s312 = smul.addr %s29, 2
          %s313 = sadd.s32 %s30, %s312
          %s314 = smul.addr %s313, 8
          %s315 = scalar_lea.hbm %s3, %s314
          %s316 = sshll.u32 %s288, 4
          %s317 = int_to_ptr.vmem [resolvable:$true] %s316
          %s318 = sshll.u32 %s315, 4
          %s319 = int_to_ptr.hbm [resolvable:$true] %s318
          %324 = dma.vmem_to_hbm [thread:$0]  %s317, 256, %s319, %s285, 128, 128, 8
        $region44: #{tpu_custom_call.1} parent=27 // pred_fallthru
          _
      $region28: #{tpu_custom_call.1} parent=5 // pred_fallthru
        _
      %p325 = scmp.le.s32.totalorder 2, %s20
      // Predicated region
      $region45: #{tpu_custom_call.1} parent=5 // pred_check
        %p326 = pneg %p325
      $region46: #{tpu_custom_call.1} parent=5 // pred_check_branch
        %328 = sbr.rel (%p326) target = $region48
      $region47: #{tpu_custom_call.1} parent=5 // pred_region
        %s329 = ssub.s32 %s20, 2
        // Predicated region
        $region49: #{tpu_custom_call.1} parent=47 // pred_check
          %p330 = pneg %p112
        $region50: #{tpu_custom_call.1} parent=47 // pred_check_branch
          %332 = sbr.rel (%p330) target = $region52
        $region51: #{tpu_custom_call.1} parent=47 // pred_region
          %s333 = sand.u32 %s97, 1
          %s334 = scalar_lea.sflag [#allocation4], %s333
          %s335 = sand.u32 %s97, 1
          %s336 = smul.addr %s335, 16
          %s337 = scalar_lea.vmem [#allocation7], %s336
          %339 = dma.done %s334, 256
        $region52: #{tpu_custom_call.1} parent=47 // pred_fallthru
          _
        // Predicated region
        $region53: #{tpu_custom_call.1} parent=47 // pred_check
          %p340 = pneg %p140
        $region54: #{tpu_custom_call.1} parent=47 // pred_check_branch
          %342 = sbr.rel (%p340) target = $region56
        $region55: #{tpu_custom_call.1} parent=47 // pred_region
          %s343 = sand.u32 %s125, 1
          %s344 = scalar_lea.sflag [#allocation9], %s343
          %s345 = sand.u32 %s125, 1
          %s346 = smul.addr %s345, 16
          %s347 = scalar_lea.vmem [#allocation8], %s346
          %349 = dma.done %s344, 256
        $region56: #{tpu_custom_call.1} parent=47 // pred_fallthru
          _
      $region48: #{tpu_custom_call.1} parent=5 // pred_fallthru
        _
    $region6: #{tpu_custom_call.1} parent=1 // loop_footer
      %s24 = sadd.s32 1, %s20
    $region7: #{tpu_custom_call.1} parent=1 // loop_footer_branch
      %19 = sbr.rel target = $region3
    $region8: #{tpu_custom_call.1} parent=1 // loop_exit
      _
    %350 = vsyncpa [#allocation3], 1
    %s351 = scalar_lea.sflag [#allocation3], 1
    %352 = vsyncpa %s351, 1
    %353 = vsyncpa [#allocation6], 1
    %s354 = scalar_lea.sflag [#allocation6], 1
    %355 = vsyncpa %s354, 1
    %356 = vsyncpa [#allocation4], 1
    %s357 = scalar_lea.sflag [#allocation4], 1
    %358 = vsyncpa %s357, 1
    %359 = vsyncpa [#allocation9], 1
    %s360 = scalar_lea.sflag [#allocation9], 1
    %361 = vsyncpa %s360, 1

// kernel: tpu_custom_call.1
$region0: #{tpu_custom_call.1}
  #allocation0 [shape = 'u32[]', space=smem, size = 0x4, offset = 0x4, fixed_abs, tag = 'smem constant byte address 0x4 - core index']
  #allocation1 [shape = 'u32[72,128]{1,0:T(1,128)}', space=vmem, size = 0x9000, scoped, tag = 'internal scratch']
  %s0 = inlined_call_operand.hbm [shape: f32[16,16], index: 0, kind: input, shape index: {}]
  %s1 = inlined_call_operand.hbm [shape: f32[2,16,32], index: 1, kind: input, shape index: {}]
  %s2 = inlined_call_operand.hbm [shape: f32[2,16,32], index: 2, kind: output, shape index: {0}]
  %s3 = inlined_call_operand.hbm [shape: f32[2,16,32], index: 3, kind: output, shape index: {1}]
  %4 = xla_tuple %s2, %s3
  %s5 = sld [smem:[#allocation0]]
  $region57: #{tpu_custom_call.1} parent=0
    _
  %s7 = ssub.s32 1, %s5
  %s8 = scalar_select 0, %s7, %s5
  $region1: #{tpu_custom_call.1} parent=0
    #allocation2 [shape = 'u8[8192]{0}', space=vmem, size = 0x2000, scoped, tag = 'input window, operand 0, single buffered']
    #allocation3 [shape = 's32[2]{0}', space=sflag, size = 0x8, scoped, tag = 'scoped memory for tpu_custom_call.1']
    #allocation4 [shape = 's32[2]{0}', space=sflag, size = 0x8, scoped, tag = 'scoped memory for tpu_custom_call.1']
    #allocation5 [shape = 'u8[16384]{0}', space=vmem, size = 0x4000, scoped, tag = 'input window, operand 1']
    #allocation6 [shape = 's32[2]{0}', space=sflag, size = 0x8, scoped, tag = 'scoped memory for tpu_custom_call.1']
    #allocation7 [shape = 'u8[16384]{0}', space=vmem, size = 0x4000, scoped, tag = 'output window, operand 0']
    #allocation8 [shape = 'u8[16384]{0}', space=vmem, size = 0x4000, scoped, tag = 'output window, operand 1']
    #allocation9 [shape = 's32[2]{0}', space=sflag, size = 0x8, scoped, tag = 'scoped memory for tpu_custom_call.1']
    %9 = vsyncpa [#allocation3], 0
    %10 = vsyncpa [#allocation6], 0
    %s11 = scalar_lea.sflag [#allocation6], 1
    %12 = vsyncpa %s11, 0
    %13 = vsyncpa [#allocation4], 0
    %s14 = scalar_lea.sflag [#allocation4], 1
    %15 = vsyncpa %s14, 0
    %16 = vsyncpa [#allocation9], 0
    %s17 = scalar_lea.sflag [#allocation9], 1
    %18 = vsyncpa %s17, 0
    loop: start=0, step=1, limit=4
    $region2: #{tpu_custom_call.1} parent=1 // loop_pre_header
      _
    $region3: #{tpu_custom_call.1} parent=1 // loop_header
      %s20 = sphi 0, %s24
      %p21 = scmp.ge.s32.totalorder %s20, 4
      %s27 = sphi 0, %s39
      %s28 = sphi 0, %s35
      %s29 = sphi 0, %s27
      %s30 = sphi 0, %s28
      %s31 = sphi 0, %s29
      %s32 = sphi 0, %s30
      %s40 = sphi 0, %s40
      %s42 = sphi 0, %s40
      %s43 = sphi 0, %s42
      %s57 = sphi 0, %s43
      %s65 = sphi 0, %s67
      %s68 = sphi 0, %s65
      %s69 = sphi 0, %s68
      %s85 = sphi 0, %s69
      %s93 = sphi 0, %s95
      %s96 = sphi 0, %s93
      %s97 = sphi 0, %s96
      %s113 = sphi 0, %s97
      %s121 = sphi 0, %s123
      %s124 = sphi 0, %s121
      %s125 = sphi 0, %s124
      %s141 = sphi 0, %s125
    $region4: #{tpu_custom_call.1} parent=1 // loop_header_branch
      %23 = sbr.rel (%p21) target = $region8
    $region5: #{tpu_custom_call.1} parent=1 // loop_body
      %s25 = ssub.s32 %s20, 1
      %s26 = ssub.s32 %s20, 2
      %s33 = sadd.s32 1, %s28
      %p34 = scmp.ge.s32.totalorder %s33, 1
      %s35 = scalar_select %p34, 0, %s33
      %s36 = sadd.s32 1, %s27
      %s37 = scalar_select %p34, %s36, %s27
      %p38 = scmp.ge.s32.totalorder %s37, 2
      %s39 = scalar_select %p38, 0, %s37
      %s41 = sadd.s32 %s40, 1
      %p44 = scmp.eq.s32.totalorder %s20, 1
      %p45 = scmp.ne.s32.totalorder %s40, %s42
      %p46 = scmp.eq.s32.totalorder %s20, 0
      %p47 = por %p45, %p46
      %p48 = scmp.ne.s32.totalorder %s40, %s42
      %p49 = scmp.eq.s32.totalorder %s25, 1
      %p50 = por %p48, %p49
      %p51 = scmp.ne.s32.totalorder %s42, %s43
      %p52 = scmp.eq.s32.totalorder %s25, 0
      %p53 = por %p51, %p52
      %p54 = scmp.ne.s32.totalorder %s42, %s43
      %p55 = scmp.eq.s32.totalorder %s26, 1
      %p56 = por %p54, %p55
      %p58 = scmp.ne.s32.totalorder %s43, %s57
      %p59 = scmp.eq.s32.totalorder %s26, 0
      %p60 = por %p58, %p59
      %s61 = ssub.s32 %s27, %s39
      %s62 = ssub.s32 %s28, %s35
      %s63 = sor.u32 %s61, %s62
      %p64 = scmp.eq.s32.totalorder %s63, 0
      %s66 = sadd.s32 %s65, 1
      %s67 = scalar_select %p64, %s65, %s66
      %p70 = pneg %p64
      %p71 = scmp.eq.s32.totalorder %s20, 1
      %p72 = por %p70, %p71
      %p73 = scmp.ne.s32.totalorder %s65, %s68
      %p74 = scmp.eq.s32.totalorder %s20, 0
      %p75 = por %p73, %p74
      %p76 = scmp.ne.s32.totalorder %s65, %s68
      %p77 = scmp.eq.s32.totalorder %s25, 1
      %p78 = por %p76, %p77
      %p79 = scmp.ne.s32.totalorder %s68, %s69
      %p80 = scmp.eq.s32.totalorder %s25, 0
      %p81 = por %p79, %p80
      %p82 = scmp.ne.s32.totalorder %s68, %s69
      %p83 = scmp.eq.s32.totalorder %s26, 1
      %p84 = por %p82, %p83
      %p86 = scmp.ne.s32.totalorder %s69, %s85
      %p87 = scmp.eq.s32.totalorder %s26, 0
      %p88 = por %p86, %p87
      %s89 = ssub.s32 %s27, %s39
      %s90 = ssub.s32 %s28, %s35
      %s91 = sor.u32 %s89, %s90
      %p92 = scmp.eq.s32.totalorder %s91, 0
      %s94 = sadd.s32 %s93, 1
      %s95 = scalar_select %p92, %s93, %s94
      %p98 = pneg %p92
      %p99 = scmp.eq.s32.totalorder %s20, 1
      %p100 = por %p98, %p99
      %p101 = scmp.ne.s32.totalorder %s93, %s96
      %p102 = scmp.eq.s32.totalorder %s20, 0
      %p103 = por %p101, %p102
      %p104 = scmp.ne.s32.totalorder %s93, %s96
      %p105 = scmp.eq.s32.totalorder %s25, 1
      %p106 = por %p104, %p105
      %p107 = scmp.ne.s32.totalorder %s96, %s97
      %p108 = scmp.eq.s32.totalorder %s25, 0
      %p109 = por %p107, %p108
      %p110 = scmp.ne.s32.totalorder %s96, %s97
      %p111 = scmp.eq.s32.totalorder %s26, 1
      %p112 = por %p110, %p111
      %p114 = scmp.ne.s32.totalorder %s97, %s113
      %p115 = scmp.eq.s32.totalorder %s26, 0
      %p116 = por %p114, %p115
      %s117 = ssub.s32 %s27, %s39
      %s118 = ssub.s32 %s28, %s35
      %s119 = sor.u32 %s117, %s118
      %p120 = scmp.eq.s32.totalorder %s119, 0
      %s122 = sadd.s32 %s121, 1
      %s123 = scalar_select %p120, %s121, %s122
      %p126 = pneg %p120
      %p127 = scmp.eq.s32.totalorder %s20, 1
      %p128 = por %p126, %p127
      %p129 = scmp.ne.s32.totalorder %s121, %s124
      %p130 = scmp.eq.s32.totalorder %s20, 0
      %p131 = por %p129, %p130
      %p132 = scmp.ne.s32.totalorder %s121, %s124
      %p133 = scmp.eq.s32.totalorder %s25, 1
      %p134 = por %p132, %p133
      %p135 = scmp.ne.s32.totalorder %s124, %s125
      %p136 = scmp.eq.s32.totalorder %s25, 0
      %p137 = por %p135, %p136
      %p138 = scmp.ne.s32.totalorder %s124, %s125
      %p139 = scmp.eq.s32.totalorder %s26, 1
      %p140 = por %p138, %p139
      %p142 = scmp.ne.s32.totalorder %s125, %s141
      %p143 = scmp.eq.s32.totalorder %s26, 0
      %p144 = por %p142, %p143
      %p145 = scmp.le.s32.totalorder 1, %s20
      %p146 = scmp.lt.s32.totalorder %s20, 3
      %p147 = pnand %p145, %p146
      %p148 = pneg %p147
      // Predicated region
      $region9: #{tpu_custom_call.1} parent=5 // pred_check
        _
      $region10: #{tpu_custom_call.1} parent=5 // pred_check_branch
        %150 = sbr.rel (%p147) target = $region12
      $region11: #{tpu_custom_call.1} parent=5 // pred_region
        %s151 = ssub.s32 %s20, 1
        // Predicated region
        $region13: #{tpu_custom_call.1} parent=11 // pred_check
          %p152 = pneg %p53
        $region14: #{tpu_custom_call.1} parent=11 // pred_check_branch
          %154 = sbr.rel (%p152) target = $region16
        $region15: #{tpu_custom_call.1} parent=11 // pred_region
          %156 = vsyncadd [#allocation3], 0
          %s157 = sshll.u32 %s0, 4
          %s158 = int_to_ptr.hbm [resolvable:$true] %s157
          %s159 = sshll.u32 [#allocation2], 4
          %s160 = int_to_ptr.vmem [resolvable:$true] %s159
          %165 = dma.hbm_to_vmem [thread:$0]  %s158, 256, %s160, [#allocation3], 128, 128, 8
        $region16: #{tpu_custom_call.1} parent=11 // pred_fallthru
          _
      $region12: #{tpu_custom_call.1} parent=5 // pred_fallthru
        _
      %p166 = scmp.lt.s32.totalorder %s20, 2
      // Predicated region
      $region17: #{tpu_custom_call.1} parent=5 // pred_check
        %p167 = pneg %p166
      $region18: #{tpu_custom_call.1} parent=5 // pred_check_branch
        %169 = sbr.rel (%p167) target = $region20
      $region19: #{tpu_custom_call.1} parent=5 // pred_region
        // Predicated region
        $region21: #{tpu_custom_call.1} parent=19 // pred_check
          %p170 = pneg %p75
        $region22: #{tpu_custom_call.1} parent=19 // pred_check_branch
          %172 = sbr.rel (%p170) target = $region24
        $region23: #{tpu_custom_call.1} parent=19 // pred_region
          %s173 = sand.u32 %s65, 1
          %s174 = scalar_lea.sflag [#allocation6], %s173
          %s175 = sand.u32 %s65, 1
          %s176 = smul.addr %s175, 16
          %s177 = scalar_lea.vmem [#allocation5], %s176
          %179 = vsyncadd %s174, 0
          %s180 = smul.addr %s27, 2
          %s181 = sadd.s32 %s28, %s180
          %s182 = smul.addr %s181, 8
          %s183 = scalar_lea.hbm %s1, %s182
          %s184 = sshll.u32 %s183, 4
          %s185 = int_to_ptr.hbm [resolvable:$true] %s184
          %s186 = sshll.u32 %s177, 4
          %s187 = int_to_ptr.vmem [resolvable:$true] %s186
          %192 = dma.hbm_to_vmem [thread:$0]  %s185, 256, %s187, %s174, 128, 128, 8
        $region24: #{tpu_custom_call.1} parent=19 // pred_fallthru
          _
      $region20: #{tpu_custom_call.1} parent=5 // pred_fallthru
        _
      %p193 = scmp.le.s32.totalorder 1, %s20
      %p194 = scmp.lt.s32.totalorder %s20, 3
      %p195 = pnand %p193, %p194
      %p196 = pneg %p195
      // Predicated region
      $region25: #{tpu_custom_call.1} parent=5 // pred_check
        _
      $region26: #{tpu_custom_call.1} parent=5 // pred_check_branch
        %198 = sbr.rel (%p195) target = $region28
      $region27: #{tpu_custom_call.1} parent=5 // pred_region
        %s199 = ssub.s32 %s20, 1
        // Predicated region
        $region29: #{tpu_custom_call.1} parent=27 // pred_check
          %p200 = pneg %p53
        $region30: #{tpu_custom_call.1} parent=27 // pred_check_branch
          %202 = sbr.rel (%p200) target = $region32
        $region31: #{tpu_custom_call.1} parent=27 // pred_region
          %204 = dma.done [#allocation3], 256
        $region32: #{tpu_custom_call.1} parent=27 // pred_fallthru
          _
        %s205 = sand.u32 %s68, 1
        %s206 = scalar_lea.sflag [#allocation6], %s205
        %s207 = sand.u32 %s68, 1
        %s208 = smul.addr %s207, 16
        %s209 = scalar_lea.vmem [#allocation5], %s208
        // Predicated region
        $region33: #{tpu_custom_call.1} parent=27 // pred_check
          %p210 = pneg %p81
        $region34: #{tpu_custom_call.1} parent=27 // pred_check_branch
          %212 = sbr.rel (%p210) target = $region36
        $region35: #{tpu_custom_call.1} parent=27 // pred_region
          %214 = dma.done %s206, 256
        $region36: #{tpu_custom_call.1} parent=27 // pred_fallthru
          _
        %p215 = pneg %p53
        %p216 = pneg %p50
        %s217 = sand.u32 %s68, 1
        %s218 = scalar_lea.sflag [#allocation6], %s217
        %s219 = sand.u32 %s68, 1
        %s220 = smul.addr %s219, 16
        %s221 = scalar_lea.vmem [#allocation5], %s220
        %p222 = pneg %p81
        %p223 = pneg %p78
        %p224 = pneg %p109
        %p225 = pneg %p106
        %s226 = sand.u32 %s96, 1
        %s227 = scalar_lea.sflag [#allocation4], %s226
        %s228 = sand.u32 %s96, 1
        %s229 = smul.addr %s228, 16
        %s230 = scalar_lea.vmem [#allocation7], %s229
        %p231 = pneg %p137
        %p232 = pneg %p134
        %s233 = sand.u32 %s124, 1
        %s234 = scalar_lea.sflag [#allocation9], %s233
        %s235 = sand.u32 %s124, 1
        %s236 = smul.addr %s235, 16
        %s237 = scalar_lea.vmem [#allocation8], %s236
        %v238 = vld [vmem:[%s209] sm:$0xff]
        %v239 = vld [vmem:[%s209 + $0x8] sm:$0xff]
        %v240 = vld [vmem:[#allocation2] sm:$0xff]
        %v241 = vld [vmem:[#allocation2 + $0x8] sm:$0xff]
        %vm242 = vcmask 130048
        %v244 = vsel %vm242, %v240, 0
        %v247 = vsel %vm242, %v241, 0
        %249 = vmatpush.msra.mxu0 0.0
        %250 = vmatpush.msra.mxu0 0.0
        %251 = vmatpush.msra.mxu0 0.0
        %252 = vmatpush.msra.mxu0 0.0
        %253 = vmatpush.msra.mxu0 0.0
        %254 = vmatpush.msra.mxu0 0.0
        %255 = vmatpush.msra.mxu0 0.0
        %256 = vmatpush.msra.mxu0 0.0
        %257 = vmatpush.msra.mxu0 0.0
        %258 = vmatpush.msra.mxu0 0.0
        %259 = vmatpush.msra.mxu0 0.0
        %260 = vmatpush.msra.mxu0 0.0
        %261 = vmatpush.msra.mxu0 0.0
        %262 = vmatpush.msra.mxu0 0.0
        %263 = vmatpush.msra.mxu0 %v239
        %264 = vmatpush.msra.mxu0 %v238
        %265 = vmatmul.f32.gmra.mxu0 %v244
        %v266 = vpop.f32.mrf.mxu0
        %v267 = vadd.f32 0.0, %v266
        %268 = vmatmul.f32.gmra.mxu0 %v247
        %v269 = vpop.f32.mrf.mxu0
        %v270 = vadd.f32 0.0, %v269
        %271 = vdwg.mxu0
        %vm272 = vcmask 261120
        %273 = vst.msk [vmem:[%s237] sm:$0xff] %vm272, %v267
        %274 = vst.msk [vmem:[%s237 + $0x8] sm:$0xff] %vm272, %v270
        %v275 = vsub.f32 %v238, %v267
        %v276 = vsub.f32 %v239, %v270
        %277 = vst.msk [vmem:[%s230] sm:$0xff] %vm272, %v275
        %278 = vst.msk [vmem:[%s230 + $0x8] sm:$0xff] %vm272, %v276
        %s279 = sand.u32 %s96, 1
        %s280 = scalar_lea.sflag [#allocation4], %s279
        %s281 = sand.u32 %s96, 1
        %s282 = smul.addr %s281, 16
        %s283 = scalar_lea.vmem [#allocation7], %s282
        %s284 = sand.u32 %s124, 1
        %s285 = scalar_lea.sflag [#allocation9], %s284
        %s286 = sand.u32 %s124, 1
        %s287 = smul.addr %s286, 16
        %s288 = scalar_lea.vmem [#allocation8], %s287
        // Predicated region
        $region37: #{tpu_custom_call.1} parent=27 // pred_check
          %p289 = pneg %p106
        $region38: #{tpu_custom_call.1} parent=27 // pred_check_branch
          %291 = sbr.rel (%p289) target = $region40
        $region39: #{tpu_custom_call.1} parent=27 // pred_region
          %293 = vsyncadd %s280, 0
          %s294 = smul.addr %s29, 2
          %s295 = sadd.s32 %s30, %s294
          %s296 = smul.addr %s295, 8
          %s297 = scalar_lea.hbm %s2, %s296
          %s298 = sshll.u32 %s283, 4
          %s299 = int_to_ptr.vmem [resolvable:$true] %s298
          %s300 = sshll.u32 %s297, 4
          %s301 = int_to_ptr.hbm [resolvable:$true] %s300
          %306 = dma.vmem_to_hbm [thread:$0]  %s299, 256, %s301, %s280, 128, 128, 8
        $region40: #{tpu_custom_call.1} parent=27 // pred_fallthru
          _
        // Predicated region
        $region41: #{tpu_custom_call.1} parent=27 // pred_check
          %p307 = pneg %p134
        $region42: #{tpu_custom_call.1} parent=27 // pred_check_branch
          %309 = sbr.rel (%p307) target = $region44
        $region43: #{tpu_custom_call.1} parent=27 // pred_region
          %311 = vsyncadd %s285, 0
          %s312 = smul.addr %s29, 2
          %s313 = sadd.s32 %s30, %s312
          %s314 = smul.addr %s313, 8
          %s315 = scalar_lea.hbm %s3, %s314
          %s316 = sshll.u32 %s288, 4
          %s317 = int_to_ptr.vmem [resolvable:$true] %s316
          %s318 = sshll.u32 %s315, 4
          %s319 = int_to_ptr.hbm [resolvable:$true] %s318
          %324 = dma.vmem_to_hbm [thread:$0]  %s317, 256, %s319, %s285, 128, 128, 8
        $region44: #{tpu_custom_call.1} parent=27 // pred_fallthru
          _
      $region28: #{tpu_custom_call.1} parent=5 // pred_fallthru
        _
      %p325 = scmp.le.s32.totalorder 2, %s20
      // Predicated region
      $region45: #{tpu_custom_call.1} parent=5 // pred_check
        %p326 = pneg %p325
      $region46: #{tpu_custom_call.1} parent=5 // pred_check_branch
        %328 = sbr.rel (%p326) target = $region48
      $region47: #{tpu_custom_call.1} parent=5 // pred_region
        %s329 = ssub.s32 %s20, 2
        // Predicated region
        $region49: #{tpu_custom_call.1} parent=47 // pred_check
          %p330 = pneg %p112
        $region50: #{tpu_custom_call.1} parent=47 // pred_check_branch
          %332 = sbr.rel (%p330) target = $region52
        $region51: #{tpu_custom_call.1} parent=47 // pred_region
          %s333 = sand.u32 %s97, 1
          %s334 = scalar_lea.sflag [#allocation4], %s333
          %s335 = sand.u32 %s97, 1
          %s336 = smul.addr %s335, 16
          %s337 = scalar_lea.vmem [#allocation7], %s336
          %339 = dma.done %s334, 256
        $region52: #{tpu_custom_call.1} parent=47 // pred_fallthru
          _
        // Predicated region
        $region53: #{tpu_custom_call.1} parent=47 // pred_check
          %p340 = pneg %p140
        $region54: #{tpu_custom_call.1} parent=47 // pred_check_branch
          %342 = sbr.rel (%p340) target = $region56
        $region55: #{tpu_custom_call.1} parent=47 // pred_region
          %s343 = sand.u32 %s125, 1
          %s344 = scalar_lea.sflag [#allocation9], %s343
          %s345 = sand.u32 %s125, 1
          %s346 = smul.addr %s345, 16
          %s347 = scalar_lea.vmem [#allocation8], %s346
          %349 = dma.done %s344, 256
        $region56: #{tpu_custom_call.1} parent=47 // pred_fallthru
          _
      $region48: #{tpu_custom_call.1} parent=5 // pred_fallthru
        _
    $region6: #{tpu_custom_call.1} parent=1 // loop_footer
      %s24 = sadd.s32 1, %s20
    $region7: #{tpu_custom_call.1} parent=1 // loop_footer_branch
      %19 = sbr.rel target = $region3
    $region8: #{tpu_custom_call.1} parent=1 // loop_exit
      _
    %350 = vsyncpa [#allocation3], 1
    %s351 = scalar_lea.sflag [#allocation3], 1
    %352 = vsyncpa %s351, 1
    %353 = vsyncpa [#allocation6], 1
    %s354 = scalar_lea.sflag [#allocation6], 1
    %355 = vsyncpa %s354, 1
    %356 = vsyncpa [#allocation4], 1
    %s357 = scalar_lea.sflag [#allocation4], 1
    %358 = vsyncpa %s357, 1
    %359 = vsyncpa [#allocation9], 1
    %s360 = scalar_lea.sflag [#allocation9], 1
    %361 = vsyncpa %s360, 1

</llo_original>
